<compile_context>
chip_gen: v6e
topology: v6e:2x2x1
jax: 0.10.0
libtpu: 0.0.40
codegen_flags: <defaults>
</compile_context>

<pallas_src>
import numpy as np
import jax
import jax.numpy as jnp
from jax.experimental import pallas as pl
from jax.experimental.pallas import tpu as pltpu


# ----------------------------- Pallas kernel -------------------------------
def make_ssnet_kernel(in_size, hidden, out_size):
    In, H, O = in_size, hidden, out_size

    def kernel(xt_ref, wslab_ref, out_ref):
        f32 = jnp.float32

        xt = xt_ref[...]                                  # (In, Bb)  batch in lanes

        # Static slices of the packed weight slab.
        w1  = wslab_ref[0:H, 0:In]                        # (H, In)
        b1  = wslab_ref[0:H, H:H + 1]                     # (H, 1)
        tt  = wslab_ref[H:2 * H, 0:H]                     # (H, H)  == T^T
        ssb = wslab_ref[H:2 * H, H:H + 1]                 # (H, 1)
        w2  = wslab_ref[2 * H:2 * H + O, 0:H]             # (O, H)
        b2  = wslab_ref[2 * H:2 * H + O, H:H + 1]         # (O, 1)

        # ---- input layer + ReLU ----
        h = jnp.dot(w1, xt, preferred_element_type=f32) + b1
        h = jnp.maximum(h, 0.0)                           # (H, Bb)

        # ---- semiseparable layer (folded dense operator) + ReLU ----
        y = jnp.dot(tt, h, preferred_element_type=f32) + ssb
        y = jnp.maximum(y, 0.0)                           # (H, Bb)

        # ---- output layer + softmax over the class dim (sublane axis) ----
        logits = jnp.dot(w2, y, preferred_element_type=f32) + b2   # (O, Bb)
        m = jnp.max(logits, axis=0, keepdims=True)
        e = jnp.exp(logits - m)
        inv = pl.reciprocal(jnp.sum(e, axis=0, keepdims=True), approx=True)
        out_ref[...] = e * inv                            # (O, Bb)

    return kernel


# ------------------- init-time folding of the SS operator ------------------
def build_ss_matrix(A, B, C, D, E, F, G, nb_states, state_dim, io_dim):
    """Return T (H, H) such that batch-major semiseparable output = h @ T.

    The layer is linear in h (zero initial states), so applying the exact
    batch-major sweep to the identity matrix yields the operator.  Runs once
    at init in plain JAX; never inside the kernel.
    """
    n, s, p = nb_states, state_dim, io_dim
    H = n * p
    eye = jnp.eye(H, dtype=jnp.float32)

    cs = jnp.zeros((H, s), jnp.float32)
    y_causal = []
    for i in range(n):
        u = eye[:, i * p:(i + 1) * p]
        y_causal.append(jnp.dot(cs, C[i].T) + jnp.dot(u, D[i].T))
        cs = jnp.dot(cs, A[i].T) + jnp.dot(u, B[i].T)

    acs = jnp.zeros((H, s), jnp.float32)
    y_anti = [None] * n
    for i in range(n - 1, -1, -1):
        y_anti[i] = jnp.dot(acs, G[i].T)
        acs = jnp.dot(acs, E[i].T) + jnp.dot(eye[:, i * p:(i + 1) * p], F[i].T)

    return jnp.concatenate([y_causal[i] + y_anti[i] for i in range(n)], axis=-1)


def prepare_params(params, nb_states, state_dim, io_dim):
    """One-time packing: fold the SS operator and build a single weight slab.

    Slab layout (rows x cols), cols = H + 1 (last column holds biases):
        rows [0 , H )   : W1 in cols [0, In),  b1 in col H
        rows [H , 2H)   : T^T in cols [0, H),  ss_bias in col H
        rows [2H, 2H+O) : W2 in cols [0, H),   b2 in col H
    """
    H, In = params["W1"].shape
    O = params["W2"].shape[0]

    T = build_ss_matrix(params["A"], params["B"], params["C"], params["D"],
                        params["E"], params["F"], params["G"],
                        nb_states, state_dim, io_dim)                 # (H, H)

    slab = jnp.zeros((2 * H + O, H + 1), jnp.float32)
    slab = slab.at[0:H, 0:In].set(jnp.asarray(params["W1"], jnp.float32))
    slab = slab.at[0:H, H].set(jnp.asarray(params["b1"], jnp.float32))
    slab = slab.at[H:2 * H, 0:H].set(T.T)
    slab = slab.at[H:2 * H, H].set(jnp.asarray(params["ss_bias"], jnp.float32))
    slab = slab.at[2 * H:2 * H + O, 0:H].set(jnp.asarray(params["W2"], jnp.float32))
    slab = slab.at[2 * H:2 * H + O, H].set(jnp.asarray(params["b2"], jnp.float32))

    return {"wslab": slab, "in_size": In, "hidden": H, "out_size": O}


# --------------------------------- wrapper ----------------------------------
def _detect_num_tensorcores():
    """Best-effort TensorCore count per device (2 on megacore chips, e.g. v7x)."""
    try:
        return max(1, int(getattr(jax.devices()[0], "num_cores", 1) or 1))
    except Exception:
        return 1


def ssnet_forward_pallas(x, prep, num_cores=None):
    batch, in_size = x.shape
    H, O, In = prep["hidden"], prep["out_size"], prep["in_size"]
    assert in_size == In
    slab = prep["wslab"]
    SR, SC = slab.shape

    if num_cores is None:
        num_cores = _detect_num_tensorcores()

    # Batch-in-lanes: feed x transposed (single XLA transpose outside the
    # kernel; callers with a (In, B) activation layout can skip it entirely).
    xt = x.T                                              # (In, B)

    # Block selection: one lane-dense block up to 128; above that, 128-lane
    # multiples capped at 4096 (VMEM is nowhere near the limit), split across
    # TensorCores on 2-TC chips so the "parallel" grid axis shards the batch.
    if batch <= 128:
        block_b = batch
    else:
        per_core = pl.cdiv(batch, num_cores) if num_cores > 1 else batch
        block_b = min(pl.cdiv(per_core, 128) * 128, 4096)
    grid = (pl.cdiv(batch, block_b),)
    # NOTE: if batch % block_b != 0 the padded trailing lanes of the last
    # block run exp() on junk data; results are discarded by Pallas, so it is
    # harmless (each lane is independent in this layout).

    kernel = make_ssnet_kernel(In, H, O)

    def call(single_buffer_weights):
        if single_buffer_weights:
            # Resident weights (constant index_map): no need for a 2nd buffer.
            wspec = pl.BlockSpec((SR, SC), lambda i: (0, 0),
                                 pipeline_mode=pl.Buffered(1))
        else:
            wspec = pl.BlockSpec((SR, SC), lambda i: (0, 0))
        return pl.pallas_call(
            kernel,
            out_shape=jax.ShapeDtypeStruct((O, batch), jnp.float32),
            grid=grid,
            in_specs=[
                pl.BlockSpec((In, block_b), lambda i: (0, i)),   # x^T (batch in lanes)
                wspec,                                           # packed weight slab
            ],
            out_specs=pl.BlockSpec((O, block_b), lambda i: (0, i)),
            compiler_params=pltpu.CompilerParams(
                dimension_semantics=("parallel",)),
        )(xt, slab)

    try:
        out_t = call(single_buffer_weights=True)
    except Exception:
        # pipeline_mode=pl.Buffered(1) unsupported on this jax/backend combo:
        # fall back to the default double-buffered resident slab (~9 KiB).
        out_t = call(single_buffer_weights=False)

    return out_t.T                                        # (B, O)


# ------------------------- pure-JAX reference ------------------------------
def ssnet_forward_ref(x, params, nb_states, state_dim, io_dim):
    n, s, p = nb_states, state_dim, io_dim
    h = jnp.maximum(x @ params["W1"].T + params["b1"], 0.0)
    hidden = h.shape[1]
    UT = h.T                                               # (H, B)
    batch = x.shape[0]
    cs = jnp.zeros((s, batch)); acs = jnp.zeros((s, batch))
    y = jnp.zeros((hidden, batch))
    for i in range(n):
        ri = slice(i * p, (i + 1) * p)
        u_c = UT[ri]
        y = y.at[ri].add(params["C"][i] @ cs + params["D"][i] @ u_c)
        cs = params["A"][i] @ cs + params["B"][i] @ u_c
        j = n - 1 - i
        rj = slice(j * p, (j + 1) * p)
        u_a = UT[rj]
        y = y.at[rj].add(params["G"][j] @ acs)
        acs = params["E"][j] @ acs + params["F"][j] @ u_a
    y = y.T + params["ss_bias"]
    y = jnp.maximum(y, 0.0)
    logits = y @ params["W2"].T + params["b2"]
    return jax.nn.softmax(logits, axis=1)


# ------------------------------- setup --------------------------------------
def glorot(key, shape):
    limit = float(np.sqrt(6.0 / sum(shape)))
    return jax.random.uniform(key, shape, jnp.float32, -limit, limit)


def init_params(key, input_size, hidden, output_size, nb_states, s, p):
    ks = jax.random.split(key, 11)
    params = {
        "W1": glorot(ks[0], (hidden, input_size)),
        "b1": glorot(ks[1], (hidden,)),
        "A": glorot(ks[2], (nb_states, s, s)),
        "B": glorot(ks[3], (nb_states, s, p)),
        "C": glorot(ks[4], (nb_states, p, s)),
        "D": glorot(ks[5], (nb_states, p, p)),
        "E": glorot(ks[6], (nb_states, s, s)),
        "F": glorot(ks[7], (nb_states, s, p)),
        "G": glorot(ks[8], (nb_states, p, s)),
        "ss_bias": glorot(ks[9], (hidden,)),
        "W2": glorot(ks[10], (output_size, hidden)),
        "b2": jnp.zeros((output_size,), jnp.float32),
    }
    return params


if __name__ == "__main__":
    batch = 8
    input_size = 8
    hidden = 32
    output_size = 4
    statespace_dim = 2
    io_dim = 2
    nb_states = hidden // io_dim

    key = jax.random.PRNGKey(0)
    kx, kp = jax.random.split(key)
    x = jax.random.normal(kx, (batch, input_size), jnp.float32)
    params = init_params(kp, input_size, hidden, output_size,
                         nb_states, statespace_dim, io_dim)

    # one-time parameter preparation (fold SS operator, pack weight slab)
    prep = prepare_params(params, nb_states, statespace_dim, io_dim)
    prep = jax.tree_util.tree_map(
        lambda v: jax.block_until_ready(v) if isinstance(v, jax.Array) else v, prep)

    out = ssnet_forward_pallas(x, prep)
    out = jax.block_until_ready(out)

    ref = ssnet_forward_ref(x, params, nb_states, statespace_dim, io_dim)
    ref = jax.block_until_ready(ref)

    # tolerance accounts for the EUP approximate reciprocal in the softmax
    np.testing.assert_allclose(np.asarray(out), np.asarray(ref),
                               rtol=5e-3, atol=5e-4)
    print("KERNEL_OK")
</pallas_src>

<mosaic_0001>
module attributes {stable_mosaic.version = 11 : i64} {
  func.func @kernel(%arg0: i32, %arg1: memref<8x8xf32, #tpu.memory_space<vmem>>, %arg2: memref<68x33xf32, #tpu.memory_space<vmem>>, %arg3: memref<4x8xf32, #tpu.memory_space<vmem>>) attributes {dimension_semantics = [#tpu.dimension_semantics<parallel>], iteration_bounds = array<i64: 1>, scalar_prefetch = 0 : i64, scratch_operands = 0 : i64, tpu.core_type = #tpu.core_type<tc>, window_params = [{transform_indices = @transform_0, window_bounds = array<i64: 8, 8>}, {pipeline_mode = #tpu.pipeline_mode<synchronous>, transform_indices = @transform_1, window_bounds = array<i64: 68, 33>}, {transform_indices = @transform_2, window_bounds = array<i64: 4, 8>}]} {
    %c0 = arith.constant 0 : index
    %c0_0 = arith.constant 0 : index
    %0 = vector.load %arg1[%c0, %c0_0] : memref<8x8xf32, #tpu.memory_space<vmem>>, vector<8x8xf32>
    %c0_1 = arith.constant 0 : index
    %c0_2 = arith.constant 0 : index
    %1 = vector.load %arg2[%c0_1, %c0_2] : memref<68x33xf32, #tpu.memory_space<vmem>>, vector<32x8xf32>
    %c0_3 = arith.constant 0 : index
    %c32 = arith.constant 32 : index
    %2 = vector.load %arg2[%c0_3, %c32] : memref<68x33xf32, #tpu.memory_space<vmem>>, vector<32x1xf32>
    %c32_4 = arith.constant 32 : index
    %c0_5 = arith.constant 0 : index
    %3 = vector.load %arg2[%c32_4, %c0_5] : memref<68x33xf32, #tpu.memory_space<vmem>>, vector<32x32xf32>
    %c32_6 = arith.constant 32 : index
    %c32_7 = arith.constant 32 : index
    %4 = vector.load %arg2[%c32_6, %c32_7] : memref<68x33xf32, #tpu.memory_space<vmem>>, vector<32x1xf32>
    %c64 = arith.constant 64 : index
    %c0_8 = arith.constant 0 : index
    %5 = vector.load %arg2[%c64, %c0_8] : memref<68x33xf32, #tpu.memory_space<vmem>>, vector<4x32xf32>
    %c64_9 = arith.constant 64 : index
    %c32_10 = arith.constant 32 : index
    %6 = vector.load %arg2[%c64_9, %c32_10] : memref<68x33xf32, #tpu.memory_space<vmem>>, vector<4x1xf32>
    %cst = arith.constant dense<0.000000e+00> : vector<32x8xf32>
    %7 = tpu.matmul %1, %0, %cst {dimension_numbers = #tpu.dot_dimension_numbers<[1], [0], [0], [1], [0, 0, 1, 1], [], []>} : vector<32x8xf32>, vector<8x8xf32>, vector<32x8xf32> -> vector<32x8xf32>
    %8 = vector.broadcast %2 : vector<32x1xf32> to vector<32x8xf32>
    %9 = arith.addf %7, %8 : vector<32x8xf32>
    %cst_11 = arith.constant 0.000000e+00 : f32
    %10 = vector.broadcast %cst_11 : f32 to vector<32x8xf32>
    %11 = arith.maximumf %9, %10 : vector<32x8xf32>
    %cst_12 = arith.constant dense<0.000000e+00> : vector<32x8xf32>
    %12 = tpu.matmul %3, %11, %cst_12 {dimension_numbers = #tpu.dot_dimension_numbers<[1], [0], [0], [1], [0, 0, 1, 1], [], []>} : vector<32x32xf32>, vector<32x8xf32>, vector<32x8xf32> -> vector<32x8xf32>
    %13 = vector.broadcast %4 : vector<32x1xf32> to vector<32x8xf32>
    %14 = arith.addf %12, %13 : vector<32x8xf32>
    %cst_13 = arith.constant 0.000000e+00 : f32
    %15 = vector.broadcast %cst_13 : f32 to vector<32x8xf32>
    %16 = arith.maximumf %14, %15 : vector<32x8xf32>
    %cst_14 = arith.constant dense<0.000000e+00> : vector<4x8xf32>
    %17 = tpu.matmul %5, %16, %cst_14 {dimension_numbers = #tpu.dot_dimension_numbers<[1], [0], [0], [1], [0, 0, 1, 1], [], []>} : vector<4x32xf32>, vector<32x8xf32>, vector<4x8xf32> -> vector<4x8xf32>
    %18 = vector.broadcast %6 : vector<4x1xf32> to vector<4x8xf32>
    %19 = arith.addf %17, %18 : vector<4x8xf32>
    %cst_15 = arith.constant dense<0xFF800000> : vector<8xf32>
    %20 = vector.multi_reduction <maximumf>, %19, %cst_15 [0] : vector<4x8xf32> to vector<8xf32>
    %21 = vector.shape_cast %20 : vector<8xf32> to vector<1x8xf32>
    %22 = vector.broadcast %21 : vector<1x8xf32> to vector<4x8xf32>
    %23 = arith.subf %19, %22 : vector<4x8xf32>
    %24 = math.exp %23 : vector<4x8xf32>
    %cst_16 = arith.constant dense<0.000000e+00> : vector<8xf32>
    %25 = vector.multi_reduction <add>, %24, %cst_16 [0] : vector<4x8xf32> to vector<8xf32>
    %26 = vector.shape_cast %25 : vector<8xf32> to vector<1x8xf32>
    %27 = tpu.reciprocal %26 {approx = true} : vector<1x8xf32> -> vector<1x8xf32>
    %28 = vector.broadcast %27 : vector<1x8xf32> to vector<4x8xf32>
    %29 = arith.mulf %24, %28 : vector<4x8xf32>
    %c0_17 = arith.constant 0 : index
    %c0_18 = arith.constant 0 : index
    %30 = vector.load %arg3[%c0_17, %c0_18] : memref<4x8xf32, #tpu.memory_space<vmem>>, vector<4x8xf32>
    tpu.vector_store %arg3[%c0_17, %c0_18], %29 {strides = array<i32>} : memref<4x8xf32, #tpu.memory_space<vmem>>, vector<4x8xf32>,
    return
  }
  func.func @transform_0(%arg0: i32) -> (i32, i32) {
    %c0_i32 = arith.constant 0 : i32
    %c0_i32_0 = arith.constant 0 : i32
    return %c0_i32, %arg0 : i32, i32
  }
  func.func @transform_1(%arg0: i32) -> (i32, i32) {
    %c0_i32 = arith.constant 0 : i32
    %c0_i32_0 = arith.constant 0 : i32
    %c0_i32_1 = arith.constant 0 : i32
    return %c0_i32, %c0_i32_0 : i32, i32
  }
  func.func @transform_2(%arg0: i32) -> (i32, i32) {
    %c0_i32 = arith.constant 0 : i32
    %c0_i32_0 = arith.constant 0 : i32
    return %c0_i32, %arg0 : i32, i32
  }
}

module attributes {stable_mosaic.version = 11 : i64} {
  func.func @kernel(%arg0: i32, %arg1: memref<8x8xf32, #tpu.memory_space<vmem>>, %arg2: memref<68x33xf32, #tpu.memory_space<vmem>>, %arg3: memref<4x8xf32, #tpu.memory_space<vmem>>) attributes {dimension_semantics = [#tpu.dimension_semantics<parallel>], iteration_bounds = array<i64: 1>, scalar_prefetch = 0 : i64, scratch_operands = 0 : i64, tpu.core_type = #tpu.core_type<tc>, window_params = [{transform_indices = @transform_0, window_bounds = array<i64: 8, 8>}, {pipeline_mode = #tpu.pipeline_mode<synchronous>, transform_indices = @transform_1, window_bounds = array<i64: 68, 33>}, {transform_indices = @transform_2, window_bounds = array<i64: 4, 8>}]} {
    %c0 = arith.constant 0 : index
    %c0_0 = arith.constant 0 : index
    %0 = vector.load %arg1[%c0, %c0_0] : memref<8x8xf32, #tpu.memory_space<vmem>>, vector<8x8xf32>
    %c0_1 = arith.constant 0 : index
    %c0_2 = arith.constant 0 : index
    %1 = vector.load %arg2[%c0_1, %c0_2] : memref<68x33xf32, #tpu.memory_space<vmem>>, vector<32x8xf32>
    %c0_3 = arith.constant 0 : index
    %c32 = arith.constant 32 : index
    %2 = vector.load %arg2[%c0_3, %c32] : memref<68x33xf32, #tpu.memory_space<vmem>>, vector<32x1xf32>
    %c32_4 = arith.constant 32 : index
    %c0_5 = arith.constant 0 : index
    %3 = vector.load %arg2[%c32_4, %c0_5] : memref<68x33xf32, #tpu.memory_space<vmem>>, vector<32x32xf32>
    %c32_6 = arith.constant 32 : index
    %c32_7 = arith.constant 32 : index
    %4 = vector.load %arg2[%c32_6, %c32_7] : memref<68x33xf32, #tpu.memory_space<vmem>>, vector<32x1xf32>
    %c64 = arith.constant 64 : index
    %c0_8 = arith.constant 0 : index
    %5 = vector.load %arg2[%c64, %c0_8] : memref<68x33xf32, #tpu.memory_space<vmem>>, vector<4x32xf32>
    %c64_9 = arith.constant 64 : index
    %c32_10 = arith.constant 32 : index
    %6 = vector.load %arg2[%c64_9, %c32_10] : memref<68x33xf32, #tpu.memory_space<vmem>>, vector<4x1xf32>
    %cst = arith.constant dense<0.000000e+00> : vector<32x8xf32>
    %7 = tpu.matmul %1, %0, %cst {dimension_numbers = #tpu.dot_dimension_numbers<[1], [0], [0], [1], [0, 0, 1, 1], [], []>} : vector<32x8xf32>, vector<8x8xf32>, vector<32x8xf32> -> vector<32x8xf32>
    %8 = vector.broadcast %2 : vector<32x1xf32> to vector<32x8xf32>
    %9 = arith.addf %7, %8 : vector<32x8xf32>
    %cst_11 = arith.constant 0.000000e+00 : f32
    %10 = vector.broadcast %cst_11 : f32 to vector<32x8xf32>
    %11 = arith.maximumf %9, %10 : vector<32x8xf32>
    %cst_12 = arith.constant dense<0.000000e+00> : vector<32x8xf32>
    %12 = tpu.matmul %3, %11, %cst_12 {dimension_numbers = #tpu.dot_dimension_numbers<[1], [0], [0], [1], [0, 0, 1, 1], [], []>} : vector<32x32xf32>, vector<32x8xf32>, vector<32x8xf32> -> vector<32x8xf32>
    %13 = vector.broadcast %4 : vector<32x1xf32> to vector<32x8xf32>
    %14 = arith.addf %12, %13 : vector<32x8xf32>
    %cst_13 = arith.constant 0.000000e+00 : f32
    %15 = vector.broadcast %cst_13 : f32 to vector<32x8xf32>
    %16 = arith.maximumf %14, %15 : vector<32x8xf32>
    %cst_14 = arith.constant dense<0.000000e+00> : vector<4x8xf32>
    %17 = tpu.matmul %5, %16, %cst_14 {dimension_numbers = #tpu.dot_dimension_numbers<[1], [0], [0], [1], [0, 0, 1, 1], [], []>} : vector<4x32xf32>, vector<32x8xf32>, vector<4x8xf32> -> vector<4x8xf32>
    %18 = vector.broadcast %6 : vector<4x1xf32> to vector<4x8xf32>
    %19 = arith.addf %17, %18 : vector<4x8xf32>
    %cst_15 = arith.constant dense<0xFF800000> : vector<8xf32>
    %20 = vector.multi_reduction <maximumf>, %19, %cst_15 [0] : vector<4x8xf32> to vector<8xf32>
    %21 = vector.shape_cast %20 : vector<8xf32> to vector<1x8xf32>
    %22 = vector.broadcast %21 : vector<1x8xf32> to vector<4x8xf32>
    %23 = arith.subf %19, %22 : vector<4x8xf32>
    %24 = math.exp %23 : vector<4x8xf32>
    %cst_16 = arith.constant dense<0.000000e+00> : vector<8xf32>
    %25 = vector.multi_reduction <add>, %24, %cst_16 [0] : vector<4x8xf32> to vector<8xf32>
    %26 = vector.shape_cast %25 : vector<8xf32> to vector<1x8xf32>
    %27 = tpu.reciprocal %26 {approx = true} : vector<1x8xf32> -> vector<1x8xf32>
    %28 = vector.broadcast %27 : vector<1x8xf32> to vector<4x8xf32>
    %29 = arith.mulf %24, %28 : vector<4x8xf32>
    %c0_17 = arith.constant 0 : index
    %c0_18 = arith.constant 0 : index
    %30 = vector.load %arg3[%c0_17, %c0_18] : memref<4x8xf32, #tpu.memory_space<vmem>>, vector<4x8xf32>
    tpu.vector_store %arg3[%c0_17, %c0_18], %29 {strides = array<i32>} : memref<4x8xf32, #tpu.memory_space<vmem>>, vector<4x8xf32>,
    return
  }
  func.func @transform_0(%arg0: i32) -> (i32, i32) {
    %c0_i32 = arith.constant 0 : i32
    %c0_i32_0 = arith.constant 0 : i32
    return %c0_i32, %arg0 : i32, i32
  }
  func.func @transform_1(%arg0: i32) -> (i32, i32) {
    %c0_i32 = arith.constant 0 : i32
    %c0_i32_0 = arith.constant 0 : i32
    %c0_i32_1 = arith.constant 0 : i32
    return %c0_i32, %c0_i32_0 : i32, i32
  }
  func.func @transform_2(%arg0: i32) -> (i32, i32) {
    %c0_i32 = arith.constant 0 : i32
    %c0_i32_0 = arith.constant 0 : i32
    return %c0_i32, %arg0 : i32, i32
  }
}

</mosaic_0001>

<llo_original>
// kernel: tpu_custom_call.1
$region0: #{tpu_custom_call.1}
  #allocation0 [shape = 'u32[]', space=smem, size = 0x4, offset = 0x4, fixed_abs, tag = 'smem constant byte address 0x4 - core index']
  #allocation1 [shape = 'u32[144,128]{1,0:T(1,128)}', space=vmem, size = 0x12000, scoped, tag = 'internal scratch']
  %s0 = inlined_call_operand.vmem [shape: f32[8,8], index: 0, kind: input, shape index: {}]
  %s1 = inlined_call_operand.vmem [shape: f32[68,33], index: 1, kind: input, shape index: {}]
  %s2 = inlined_call_operand.hbm [shape: f32[4,8], index: 2, kind: output, shape index: {}]
  %s3 = sld [smem:[#allocation0]]
  $region18: #{tpu_custom_call.1} parent=0
    _
  %s5 = ssub.s32 1, %s3
  %s6 = scalar_select 0, %s5, %s3
  $region1: #{tpu_custom_call.1} parent=0
    #allocation2 [shape = 'u8[2048]{0}', space=vmem, size = 0x800, scoped, tag = 'output window, operand 0, single buffered']
    #allocation3 [shape = 's32[1]{0}', space=sflag, size = 0x4, scoped, tag = 'scoped memory for tpu_custom_call.1']
    %7 = vsyncpa [#allocation3], 0
    // Predicated region
    $region2: #{tpu_custom_call.1} parent=1 // pred_check
      _
    $region3: #{tpu_custom_call.1} parent=1 // pred_check_branch
      %9 = sbr.rel (0) target = $region5
    $region4: #{tpu_custom_call.1} parent=1 // pred_region
      _
    $region5: #{tpu_custom_call.1} parent=1 // pred_fallthru
      _
    // Predicated region
    $region6: #{tpu_custom_call.1} parent=1 // pred_check
      _
    $region7: #{tpu_custom_call.1} parent=1 // pred_check_branch
      %11 = sbr.rel (0) target = $region9
    $region8: #{tpu_custom_call.1} parent=1 // pred_region
      _
    $region9: #{tpu_custom_call.1} parent=1 // pred_fallthru
      _
    %v12 = vld [vmem:[%s0] sm:$0xff]
    %v13 = vld [vmem:[%s1] sm:$0xff]
    %v14 = vld [vmem:[%s1 + $0x8] sm:$0xff]
    %v15 = vld [vmem:[%s1 + $0x10] sm:$0xff]
    %v16 = vld [vmem:[%s1 + $0x18] sm:$0xff]
    %v17 = vld [vmem:[%s1 + $0x20] sm:$0xff]
    %v18 = vld [vmem:[%s1 + $0x28] sm:$0xff]
    %v19 = vld [vmem:[%s1 + $0x30] sm:$0xff]
    %v20 = vld [vmem:[%s1 + $0x38] sm:$0xff]
    %v21 = vld [vmem:[%s1 + $0x40] sm:$0xf]
    %23 = vset.pattern.permute.xlu0 32
    %24 = vperm.xlu0 %23, %v13
    %v25 = vpop.permute.xlu0 %24
    %28 = vset.pattern.permute.xlu0 32
    %29 = vperm.xlu0 %28, %v14
    %v30 = vpop.permute.xlu0 %29
    %33 = vset.pattern.permute.xlu0 32
    %34 = vperm.xlu0 %33, %v15
    %v35 = vpop.permute.xlu0 %34
    %38 = vset.pattern.permute.xlu0 32
    %39 = vperm.xlu0 %38, %v16
    %v40 = vpop.permute.xlu0 %39
    %vm42 = vcmask 64512
    %v43 = vsel %vm42, %v13, 0
    %v45 = vsel %vm42, %v14, 0
    %v47 = vsel %vm42, %v15, 0
    %v49 = vsel %vm42, %v16, 0
    %51 = vmatprep.subr.mxu0 0.0
    %52 = vmatpush1.msra.mxu0 0.0
    %53 = vmatprep.subr.mxu0 0.0
    %54 = vmatpush1.msra.mxu0 0.0
    %55 = vmatprep.subr.mxu0 0.0
    %56 = vmatpush1.msra.mxu0 0.0
    %57 = vmatprep.subr.mxu0 0.0
    %58 = vmatpush1.msra.mxu0 0.0
    %59 = vmatprep.subr.mxu0 0.0
    %60 = vmatpush1.msra.mxu0 0.0
    %61 = vmatprep.subr.mxu0 0.0
    %62 = vmatpush1.msra.mxu0 0.0
    %63 = vmatprep.subr.mxu0 0.0
    %64 = vmatpush1.msra.mxu0 0.0
    %65 = vmatprep.subr.mxu0 0.0
    %66 = vmatpush1.msra.mxu0 0.0
    %67 = vmatprep.subr.mxu0 0.0
    %68 = vmatpush1.msra.mxu0 0.0
    %69 = vmatprep.subr.mxu0 0.0
    %70 = vmatpush1.msra.mxu0 0.0
    %71 = vmatprep.subr.mxu0 0.0
    %72 = vmatpush1.msra.mxu0 0.0
    %73 = vmatprep.subr.mxu0 0.0
    %74 = vmatpush1.msra.mxu0 0.0
    %75 = vmatprep.subr.mxu0 0.0
    %76 = vmatpush1.msra.mxu0 0.0
    %77 = vmatprep.subr.mxu0 0.0
    %78 = vmatpush1.msra.mxu0 0.0
    %79 = vmatprep.subr.mxu0 0.0
    %80 = vmatpush1.msra.mxu0 0.0
    %81 = vmatprep.subr.mxu0 0.0
    %82 = vmatpush1.msra.mxu0 %v12
    %83 = vmatprep.subr.mxu0 0.0
    %84 = vmatpush2.msra.mxu0 0.0
    %85 = vmatprep.subr.mxu0 0.0
    %86 = vmatpush2.msra.mxu0 0.0
    %87 = vmatprep.subr.mxu0 0.0
    %88 = vmatpush2.msra.mxu0 0.0
    %89 = vmatprep.subr.mxu0 0.0
    %90 = vmatpush2.msra.mxu0 0.0
    %91 = vmatprep.subr.mxu0 0.0
    %92 = vmatpush2.msra.mxu0 0.0
    %93 = vmatprep.subr.mxu0 0.0
    %94 = vmatpush2.msra.mxu0 0.0
    %95 = vmatprep.subr.mxu0 0.0
    %96 = vmatpush2.msra.mxu0 0.0
    %97 = vmatprep.subr.mxu0 0.0
    %98 = vmatpush2.msra.mxu0 0.0
    %99 = vmatprep.subr.mxu0 0.0
    %100 = vmatpush2.msra.mxu0 0.0
    %101 = vmatprep.subr.mxu0 0.0
    %102 = vmatpush2.msra.mxu0 0.0
    %103 = vmatprep.subr.mxu0 0.0
    %104 = vmatpush2.msra.mxu0 0.0
    %105 = vmatprep.subr.mxu0 0.0
    %106 = vmatpush2.msra.mxu0 0.0
    %107 = vmatprep.subr.mxu0 0.0
    %108 = vmatpush2.msra.mxu0 0.0
    %109 = vmatprep.subr.mxu0 0.0
    %110 = vmatpush2.msra.mxu0 0.0
    %111 = vmatprep.subr.mxu0 0.0
    %112 = vmatpush2.msra.mxu0 0.0
    %113 = vmatprep.subr.mxu0 0.0
    %114 = vmatpush2.msra.mxu0 0.0
    %115 = vmatprep.mubr.f32.mxu0 0.0
    %116 = vmatmul.mubr.f32.gmra.mxu0 %v43
    %v117 = vpop.f32.mrf.mxu0
    %v118 = vadd.f32 %v25, %v117
    %v119 = vpop.f32.mrf.mxu0
    %120 = vmatprep.mubr.f32.mxu0 0.0
    %121 = vmatmul.mubr.f32.gmra.mxu0 %v45
    %v122 = vpop.f32.mrf.mxu0
    %v123 = vadd.f32 %v30, %v122
    %v124 = vpop.f32.mrf.mxu0
    %125 = vmatprep.mubr.f32.mxu0 0.0
    %126 = vmatmul.mubr.f32.gmra.mxu0 %v47
    %v127 = vpop.f32.mrf.mxu0
    %v128 = vadd.f32 %v35, %v127
    %v129 = vpop.f32.mrf.mxu0
    %130 = vmatprep.mubr.f32.mxu0 0.0
    %131 = vmatmul.mubr.f32.gmra.mxu0 %v49
    %v132 = vpop.f32.mrf.mxu0
    %v133 = vadd.f32 %v40, %v132
    %v134 = vpop.f32.mrf.mxu0
    %135 = vdwg.mxu0
    %v136 = vmax.f32 %v118, 0.0
    %v137 = vmax.f32 %v123, 0.0
    %v138 = vmax.f32 %v128, 0.0
    %v139 = vmax.f32 %v133, 0.0
    %141 = vset.pattern.permute.xlu0 32
    %142 = vperm.xlu0 %141, %v17
    %v143 = vpop.permute.xlu0 %142
    %146 = vset.pattern.permute.xlu0 32
    %147 = vperm.xlu0 %146, %v18
    %v148 = vpop.permute.xlu0 %147
    %151 = vset.pattern.permute.xlu0 32
    %152 = vperm.xlu0 %151, %v19
    %v153 = vpop.permute.xlu0 %152
    %156 = vset.pattern.permute.xlu0 32
    %157 = vperm.xlu0 %156, %v20
    %v158 = vpop.permute.xlu0 %157
    %vm160 = vcmask 261120
    %v161 = vsel %vm160, %v17, 0
    %v163 = vsel %vm160, %v18, 0
    %v165 = vsel %vm160, %v19, 0
    %v167 = vsel %vm160, %v20, 0
    %169 = vmatprep.subr.mxu0 0.0
    %170 = vmatpush1.msra.mxu0 0.0
    %171 = vmatprep.subr.mxu0 0.0
    %172 = vmatpush1.msra.mxu0 0.0
    %173 = vmatprep.subr.mxu0 0.0
    %174 = vmatpush1.msra.mxu0 0.0
    %175 = vmatprep.subr.mxu0 0.0
    %176 = vmatpush1.msra.mxu0 0.0
    %177 = vmatprep.subr.mxu0 0.0
    %178 = vmatpush1.msra.mxu0 0.0
    %179 = vmatprep.subr.mxu0 0.0
    %180 = vmatpush1.msra.mxu0 0.0
    %181 = vmatprep.subr.mxu0 0.0
    %182 = vmatpush1.msra.mxu0 0.0
    %183 = vmatprep.subr.mxu0 0.0
    %184 = vmatpush1.msra.mxu0 0.0
    %185 = vmatprep.subr.mxu0 0.0
    %186 = vmatpush1.msra.mxu0 0.0
    %187 = vmatprep.subr.mxu0 0.0
    %188 = vmatpush1.msra.mxu0 0.0
    %189 = vmatprep.subr.mxu0 0.0
    %190 = vmatpush1.msra.mxu0 0.0
    %191 = vmatprep.subr.mxu0 0.0
    %192 = vmatpush1.msra.mxu0 0.0
    %193 = vmatprep.subr.mxu0 0.0
    %194 = vmatpush1.msra.mxu0 %v139
    %195 = vmatprep.subr.mxu0 0.0
    %196 = vmatpush1.msra.mxu0 %v138
    %197 = vmatprep.subr.mxu0 0.0
    %198 = vmatpush1.msra.mxu0 %v137
    %199 = vmatprep.subr.mxu0 0.0
    %200 = vmatpush1.msra.mxu0 %v136
    %201 = vmatprep.subr.mxu0 0.0
    %202 = vmatpush2.msra.mxu0 0.0
    %203 = vmatprep.subr.mxu0 0.0
    %204 = vmatpush2.msra.mxu0 0.0
    %205 = vmatprep.subr.mxu0 0.0
    %206 = vmatpush2.msra.mxu0 0.0
    %207 = vmatprep.subr.mxu0 0.0
    %208 = vmatpush2.msra.mxu0 0.0
    %209 = vmatprep.subr.mxu0 0.0
    %210 = vmatpush2.msra.mxu0 0.0
    %211 = vmatprep.subr.mxu0 0.0
    %212 = vmatpush2.msra.mxu0 0.0
    %213 = vmatprep.subr.mxu0 0.0
    %214 = vmatpush2.msra.mxu0 0.0
    %215 = vmatprep.subr.mxu0 0.0
    %216 = vmatpush2.msra.mxu0 0.0
    %217 = vmatprep.subr.mxu0 0.0
    %218 = vmatpush2.msra.mxu0 0.0
    %219 = vmatprep.subr.mxu0 0.0
    %220 = vmatpush2.msra.mxu0 0.0
    %221 = vmatprep.subr.mxu0 0.0
    %222 = vmatpush2.msra.mxu0 0.0
    %223 = vmatprep.subr.mxu0 0.0
    %224 = vmatpush2.msra.mxu0 0.0
    %225 = vmatprep.subr.mxu0 0.0
    %226 = vmatpush2.msra.mxu0 0.0
    %227 = vmatprep.subr.mxu0 0.0
    %228 = vmatpush2.msra.mxu0 0.0
    %229 = vmatprep.subr.mxu0 0.0
    %230 = vmatpush2.msra.mxu0 0.0
    %231 = vmatprep.subr.mxu0 0.0
    %232 = vmatpush2.msra.mxu0 0.0
    %233 = vmatprep.mubr.f32.mxu0 0.0
    %234 = vmatmul.mubr.f32.gmra.mxu0 %v161
    %v235 = vpop.f32.mrf.mxu0
    %v236 = vadd.f32 %v143, %v235
    %v237 = vpop.f32.mrf.mxu0
    %238 = vmatprep.mubr.f32.mxu0 0.0
    %239 = vmatmul.mubr.f32.gmra.mxu0 %v163
    %v240 = vpop.f32.mrf.mxu0
    %v241 = vadd.f32 %v148, %v240
    %v242 = vpop.f32.mrf.mxu0
    %243 = vmatprep.mubr.f32.mxu0 0.0
    %244 = vmatmul.mubr.f32.gmra.mxu0 %v165
    %v245 = vpop.f32.mrf.mxu0
    %v246 = vadd.f32 %v153, %v245
    %v247 = vpop.f32.mrf.mxu0
    %248 = vmatprep.mubr.f32.mxu0 0.0
    %249 = vmatmul.mubr.f32.gmra.mxu0 %v167
    %v250 = vpop.f32.mrf.mxu0
    %v251 = vadd.f32 %v158, %v250
    %v252 = vpop.f32.mrf.mxu0
    %253 = vdwg.mxu0
    %v254 = vmax.f32 %v236, 0.0
    %v255 = vmax.f32 %v241, 0.0
    %v256 = vmax.f32 %v246, 0.0
    %v257 = vmax.f32 %v251, 0.0
    %259 = vset.pattern.permute.xlu0 32
    %260 = vperm.xlu0 %259, %v21
    %v261 = vpop.permute.xlu0 %260
    %v263 = vsel %vm160, %v21, 0
    %265 = vmatprep.subr.mxu0 0.0
    %266 = vmatpush1.msra.mxu0 0.0
    %267 = vmatprep.subr.mxu0 0.0
    %268 = vmatpush1.msra.mxu0 0.0
    %269 = vmatprep.subr.mxu0 0.0
    %270 = vmatpush1.msra.mxu0 0.0
    %271 = vmatprep.subr.mxu0 0.0
    %272 = vmatpush1.msra.mxu0 0.0
    %273 = vmatprep.subr.mxu0 0.0
    %274 = vmatpush1.msra.mxu0 0.0
    %275 = vmatprep.subr.mxu0 0.0
    %276 = vmatpush1.msra.mxu0 0.0
    %277 = vmatprep.subr.mxu0 0.0
    %278 = vmatpush1.msra.mxu0 0.0
    %279 = vmatprep.subr.mxu0 0.0
    %280 = vmatpush1.msra.mxu0 0.0
    %281 = vmatprep.subr.mxu0 0.0
    %282 = vmatpush1.msra.mxu0 0.0
    %283 = vmatprep.subr.mxu0 0.0
    %284 = vmatpush1.msra.mxu0 0.0
    %285 = vmatprep.subr.mxu0 0.0
    %286 = vmatpush1.msra.mxu0 0.0
    %287 = vmatprep.subr.mxu0 0.0
    %288 = vmatpush1.msra.mxu0 0.0
    %289 = vmatprep.subr.mxu0 0.0
    %290 = vmatpush1.msra.mxu0 %v257
    %291 = vmatprep.subr.mxu0 0.0
    %292 = vmatpush1.msra.mxu0 %v256
    %293 = vmatprep.subr.mxu0 0.0
    %294 = vmatpush1.msra.mxu0 %v255
    %295 = vmatprep.subr.mxu0 0.0
    %296 = vmatpush1.msra.mxu0 %v254
    %297 = vmatprep.subr.mxu0 0.0
    %298 = vmatpush2.msra.mxu0 0.0
    %299 = vmatprep.subr.mxu0 0.0
    %300 = vmatpush2.msra.mxu0 0.0
    %301 = vmatprep.subr.mxu0 0.0
    %302 = vmatpush2.msra.mxu0 0.0
    %303 = vmatprep.subr.mxu0 0.0
    %304 = vmatpush2.msra.mxu0 0.0
    %305 = vmatprep.subr.mxu0 0.0
    %306 = vmatpush2.msra.mxu0 0.0
    %307 = vmatprep.subr.mxu0 0.0
    %308 = vmatpush2.msra.mxu0 0.0
    %309 = vmatprep.subr.mxu0 0.0
    %310 = vmatpush2.msra.mxu0 0.0
    %311 = vmatprep.subr.mxu0 0.0
    %312 = vmatpush2.msra.mxu0 0.0
    %313 = vmatprep.subr.mxu0 0.0
    %314 = vmatpush2.msra.mxu0 0.0
    %315 = vmatprep.subr.mxu0 0.0
    %316 = vmatpush2.msra.mxu0 0.0
    %317 = vmatprep.subr.mxu0 0.0
    %318 = vmatpush2.msra.mxu0 0.0
    %319 = vmatprep.subr.mxu0 0.0
    %320 = vmatpush2.msra.mxu0 0.0
    %321 = vmatprep.subr.mxu0 0.0
    %322 = vmatpush2.msra.mxu0 0.0
    %323 = vmatprep.subr.mxu0 0.0
    %324 = vmatpush2.msra.mxu0 0.0
    %325 = vmatprep.subr.mxu0 0.0
    %326 = vmatpush2.msra.mxu0 0.0
    %327 = vmatprep.subr.mxu0 0.0
    %328 = vmatpush2.msra.mxu0 0.0
    %329 = vmatprep.mubr.f32.mxu0 0.0
    %330 = vmatmul.mubr.f32.gmra.mxu0 %v263
    %v331 = vpop.f32.mrf.mxu0
    %v332 = vadd.f32 %v261, %v331
    %v333 = vpop.f32.mrf.mxu0
    %334 = vdwg.mxu0
    %vm335 = vcmask 60416
    %v336 = vsel %vm335, %v332, -inf
    %v337 = vrot.slane %v336, 4
    %v338 = vmax.f32 %v336, %v337
    %v339 = vrot.slane %v338, 2
    %v340 = vmax.f32 %v338, %v339
    %v341 = vrot.slane %v340, 1
    %v342 = vmax.f32 %v340, %v341
    %v343 = vsub.f32 %v332, %v342
    %v344 = vmul.f32 %v343, 1.442695
    %v345 = vpow.pop %v344
    %v346 = vsel %vm335, %v345, 0.0
    %v347 = vrot.slane %v346, 4
    %v348 = vadd.f32 %v346, %v347
    %v349 = vrot.slane %v348, 2
    %v350 = vadd.f32 %v348, %v349
    %v351 = vrot.slane %v350, 1
    %v352 = vadd.f32 %v350, %v351
    %v353 = vrcp.pop %v352
    %v354 = vmul.f32 %v345, %v353
    %355 = vst.msk [vmem:[#allocation2] sm:$0xf] %vm335, %v354
    // Predicated region
    $region10: #{tpu_custom_call.1} parent=1 // pred_check
      _
    $region11: #{tpu_custom_call.1} parent=1 // pred_check_branch
      %357 = sbr.rel (0) target = $region13
    $region12: #{tpu_custom_call.1} parent=1 // pred_region
      %s359 = ssub.s32 64, 64
      %360 = vsyncadd [#allocation3], %s359
      %s362 = sshll.u32 [#allocation2], 4
      %s363 = int_to_ptr.vmem [resolvable:$true] %s362
      %365 = dma.vmem_to_hbm [thread:$0]  %s363, 64, %s2, [#allocation3]
    $region13: #{tpu_custom_call.1} parent=1 // pred_fallthru
      _
    // Predicated region
    $region14: #{tpu_custom_call.1} parent=1 // pred_check
      _
    $region15: #{tpu_custom_call.1} parent=1 // pred_check_branch
      %367 = sbr.rel (0) target = $region17
    $region16: #{tpu_custom_call.1} parent=1 // pred_region
      %368 = dma.done [#allocation3], 64
    $region17: #{tpu_custom_call.1} parent=1 // pred_fallthru
      _
    %369 = vsyncpa [#allocation3], 1

// kernel: tpu_custom_call.1
$region0: #{tpu_custom_call.1}
  #allocation0 [shape = 'u32[]', space=smem, size = 0x4, offset = 0x4, fixed_abs, tag = 'smem constant byte address 0x4 - core index']
  #allocation1 [shape = 'u32[144,128]{1,0:T(1,128)}', space=vmem, size = 0x12000, scoped, tag = 'internal scratch']
  %s0 = inlined_call_operand.vmem [shape: f32[8,8], index: 0, kind: input, shape index: {}]
  %s1 = inlined_call_operand.vmem [shape: f32[68,33], index: 1, kind: input, shape index: {}]
  %s2 = inlined_call_operand.hbm [shape: f32[4,8], index: 2, kind: output, shape index: {}]
  %s3 = sld [smem:[#allocation0]]
  $region18: #{tpu_custom_call.1} parent=0
    _
  %s5 = ssub.s32 1, %s3
  %s6 = scalar_select 0, %s5, %s3
  $region1: #{tpu_custom_call.1} parent=0
    #allocation2 [shape = 'u8[2048]{0}', space=vmem, size = 0x800, scoped, tag = 'output window, operand 0, single buffered']
    #allocation3 [shape = 's32[1]{0}', space=sflag, size = 0x4, scoped, tag = 'scoped memory for tpu_custom_call.1']
    %7 = vsyncpa [#allocation3], 0
    // Predicated region
    $region2: #{tpu_custom_call.1} parent=1 // pred_check
      _
    $region3: #{tpu_custom_call.1} parent=1 // pred_check_branch
      %9 = sbr.rel (0) target = $region5
    $region4: #{tpu_custom_call.1} parent=1 // pred_region
      _
    $region5: #{tpu_custom_call.1} parent=1 // pred_fallthru
      _
    // Predicated region
    $region6: #{tpu_custom_call.1} parent=1 // pred_check
      _
    $region7: #{tpu_custom_call.1} parent=1 // pred_check_branch
      %11 = sbr.rel (0) target = $region9
    $region8: #{tpu_custom_call.1} parent=1 // pred_region
      _
    $region9: #{tpu_custom_call.1} parent=1 // pred_fallthru
      _
    %v12 = vld [vmem:[%s0] sm:$0xff]
    %v13 = vld [vmem:[%s1] sm:$0xff]
    %v14 = vld [vmem:[%s1 + $0x8] sm:$0xff]
    %v15 = vld [vmem:[%s1 + $0x10] sm:$0xff]
    %v16 = vld [vmem:[%s1 + $0x18] sm:$0xff]
    %v17 = vld [vmem:[%s1 + $0x20] sm:$0xff]
    %v18 = vld [vmem:[%s1 + $0x28] sm:$0xff]
    %v19 = vld [vmem:[%s1 + $0x30] sm:$0xff]
    %v20 = vld [vmem:[%s1 + $0x38] sm:$0xff]
    %v21 = vld [vmem:[%s1 + $0x40] sm:$0xf]
    %23 = vset.pattern.permute.xlu0 32
    %24 = vperm.xlu0 %23, %v13
    %v25 = vpop.permute.xlu0 %24
    %28 = vset.pattern.permute.xlu0 32
    %29 = vperm.xlu0 %28, %v14
    %v30 = vpop.permute.xlu0 %29
    %33 = vset.pattern.permute.xlu0 32
    %34 = vperm.xlu0 %33, %v15
    %v35 = vpop.permute.xlu0 %34
    %38 = vset.pattern.permute.xlu0 32
    %39 = vperm.xlu0 %38, %v16
    %v40 = vpop.permute.xlu0 %39
    %vm42 = vcmask 64512
    %v43 = vsel %vm42, %v13, 0
    %v45 = vsel %vm42, %v14, 0
    %v47 = vsel %vm42, %v15, 0
    %v49 = vsel %vm42, %v16, 0
    %51 = vmatprep.subr.mxu0 0.0
    %52 = vmatpush1.msra.mxu0 0.0
    %53 = vmatprep.subr.mxu0 0.0
    %54 = vmatpush1.msra.mxu0 0.0
    %55 = vmatprep.subr.mxu0 0.0
    %56 = vmatpush1.msra.mxu0 0.0
    %57 = vmatprep.subr.mxu0 0.0
    %58 = vmatpush1.msra.mxu0 0.0
    %59 = vmatprep.subr.mxu0 0.0
    %60 = vmatpush1.msra.mxu0 0.0
    %61 = vmatprep.subr.mxu0 0.0
    %62 = vmatpush1.msra.mxu0 0.0
    %63 = vmatprep.subr.mxu0 0.0
    %64 = vmatpush1.msra.mxu0 0.0
    %65 = vmatprep.subr.mxu0 0.0
    %66 = vmatpush1.msra.mxu0 0.0
    %67 = vmatprep.subr.mxu0 0.0
    %68 = vmatpush1.msra.mxu0 0.0
    %69 = vmatprep.subr.mxu0 0.0
    %70 = vmatpush1.msra.mxu0 0.0
    %71 = vmatprep.subr.mxu0 0.0
    %72 = vmatpush1.msra.mxu0 0.0
    %73 = vmatprep.subr.mxu0 0.0
    %74 = vmatpush1.msra.mxu0 0.0
    %75 = vmatprep.subr.mxu0 0.0
    %76 = vmatpush1.msra.mxu0 0.0
    %77 = vmatprep.subr.mxu0 0.0
    %78 = vmatpush1.msra.mxu0 0.0
    %79 = vmatprep.subr.mxu0 0.0
    %80 = vmatpush1.msra.mxu0 0.0
    %81 = vmatprep.subr.mxu0 0.0
    %82 = vmatpush1.msra.mxu0 %v12
    %83 = vmatprep.subr.mxu0 0.0
    %84 = vmatpush2.msra.mxu0 0.0
    %85 = vmatprep.subr.mxu0 0.0
    %86 = vmatpush2.msra.mxu0 0.0
    %87 = vmatprep.subr.mxu0 0.0
    %88 = vmatpush2.msra.mxu0 0.0
    %89 = vmatprep.subr.mxu0 0.0
    %90 = vmatpush2.msra.mxu0 0.0
    %91 = vmatprep.subr.mxu0 0.0
    %92 = vmatpush2.msra.mxu0 0.0
    %93 = vmatprep.subr.mxu0 0.0
    %94 = vmatpush2.msra.mxu0 0.0
    %95 = vmatprep.subr.mxu0 0.0
    %96 = vmatpush2.msra.mxu0 0.0
    %97 = vmatprep.subr.mxu0 0.0
    %98 = vmatpush2.msra.mxu0 0.0
    %99 = vmatprep.subr.mxu0 0.0
    %100 = vmatpush2.msra.mxu0 0.0
    %101 = vmatprep.subr.mxu0 0.0
    %102 = vmatpush2.msra.mxu0 0.0
    %103 = vmatprep.subr.mxu0 0.0
    %104 = vmatpush2.msra.mxu0 0.0
    %105 = vmatprep.subr.mxu0 0.0
    %106 = vmatpush2.msra.mxu0 0.0
    %107 = vmatprep.subr.mxu0 0.0
    %108 = vmatpush2.msra.mxu0 0.0
    %109 = vmatprep.subr.mxu0 0.0
    %110 = vmatpush2.msra.mxu0 0.0
    %111 = vmatprep.subr.mxu0 0.0
    %112 = vmatpush2.msra.mxu0 0.0
    %113 = vmatprep.subr.mxu0 0.0
    %114 = vmatpush2.msra.mxu0 0.0
    %115 = vmatprep.mubr.f32.mxu0 0.0
    %116 = vmatmul.mubr.f32.gmra.mxu0 %v43
    %v117 = vpop.f32.mrf.mxu0
    %v118 = vadd.f32 %v25, %v117
    %v119 = vpop.f32.mrf.mxu0
    %120 = vmatprep.mubr.f32.mxu0 0.0
    %121 = vmatmul.mubr.f32.gmra.mxu0 %v45
    %v122 = vpop.f32.mrf.mxu0
    %v123 = vadd.f32 %v30, %v122
    %v124 = vpop.f32.mrf.mxu0
    %125 = vmatprep.mubr.f32.mxu0 0.0
    %126 = vmatmul.mubr.f32.gmra.mxu0 %v47
    %v127 = vpop.f32.mrf.mxu0
    %v128 = vadd.f32 %v35, %v127
    %v129 = vpop.f32.mrf.mxu0
    %130 = vmatprep.mubr.f32.mxu0 0.0
    %131 = vmatmul.mubr.f32.gmra.mxu0 %v49
    %v132 = vpop.f32.mrf.mxu0
    %v133 = vadd.f32 %v40, %v132
    %v134 = vpop.f32.mrf.mxu0
    %135 = vdwg.mxu0
    %v136 = vmax.f32 %v118, 0.0
    %v137 = vmax.f32 %v123, 0.0
    %v138 = vmax.f32 %v128, 0.0
    %v139 = vmax.f32 %v133, 0.0
    %141 = vset.pattern.permute.xlu0 32
    %142 = vperm.xlu0 %141, %v17
    %v143 = vpop.permute.xlu0 %142
    %146 = vset.pattern.permute.xlu0 32
    %147 = vperm.xlu0 %146, %v18
    %v148 = vpop.permute.xlu0 %147
    %151 = vset.pattern.permute.xlu0 32
    %152 = vperm.xlu0 %151, %v19
    %v153 = vpop.permute.xlu0 %152
    %156 = vset.pattern.permute.xlu0 32
    %157 = vperm.xlu0 %156, %v20
    %v158 = vpop.permute.xlu0 %157
    %vm160 = vcmask 261120
    %v161 = vsel %vm160, %v17, 0
    %v163 = vsel %vm160, %v18, 0
    %v165 = vsel %vm160, %v19, 0
    %v167 = vsel %vm160, %v20, 0
    %169 = vmatprep.subr.mxu0 0.0
    %170 = vmatpush1.msra.mxu0 0.0
    %171 = vmatprep.subr.mxu0 0.0
    %172 = vmatpush1.msra.mxu0 0.0
    %173 = vmatprep.subr.mxu0 0.0
    %174 = vmatpush1.msra.mxu0 0.0
    %175 = vmatprep.subr.mxu0 0.0
    %176 = vmatpush1.msra.mxu0 0.0
    %177 = vmatprep.subr.mxu0 0.0
    %178 = vmatpush1.msra.mxu0 0.0
    %179 = vmatprep.subr.mxu0 0.0
    %180 = vmatpush1.msra.mxu0 0.0
    %181 = vmatprep.subr.mxu0 0.0
    %182 = vmatpush1.msra.mxu0 0.0
    %183 = vmatprep.subr.mxu0 0.0
    %184 = vmatpush1.msra.mxu0 0.0
    %185 = vmatprep.subr.mxu0 0.0
    %186 = vmatpush1.msra.mxu0 0.0
    %187 = vmatprep.subr.mxu0 0.0
    %188 = vmatpush1.msra.mxu0 0.0
    %189 = vmatprep.subr.mxu0 0.0
    %190 = vmatpush1.msra.mxu0 0.0
    %191 = vmatprep.subr.mxu0 0.0
    %192 = vmatpush1.msra.mxu0 0.0
    %193 = vmatprep.subr.mxu0 0.0
    %194 = vmatpush1.msra.mxu0 %v139
    %195 = vmatprep.subr.mxu0 0.0
    %196 = vmatpush1.msra.mxu0 %v138
    %197 = vmatprep.subr.mxu0 0.0
    %198 = vmatpush1.msra.mxu0 %v137
    %199 = vmatprep.subr.mxu0 0.0
    %200 = vmatpush1.msra.mxu0 %v136
    %201 = vmatprep.subr.mxu0 0.0
    %202 = vmatpush2.msra.mxu0 0.0
    %203 = vmatprep.subr.mxu0 0.0
    %204 = vmatpush2.msra.mxu0 0.0
    %205 = vmatprep.subr.mxu0 0.0
    %206 = vmatpush2.msra.mxu0 0.0
    %207 = vmatprep.subr.mxu0 0.0
    %208 = vmatpush2.msra.mxu0 0.0
    %209 = vmatprep.subr.mxu0 0.0
    %210 = vmatpush2.msra.mxu0 0.0
    %211 = vmatprep.subr.mxu0 0.0
    %212 = vmatpush2.msra.mxu0 0.0
    %213 = vmatprep.subr.mxu0 0.0
    %214 = vmatpush2.msra.mxu0 0.0
    %215 = vmatprep.subr.mxu0 0.0
    %216 = vmatpush2.msra.mxu0 0.0
    %217 = vmatprep.subr.mxu0 0.0
    %218 = vmatpush2.msra.mxu0 0.0
    %219 = vmatprep.subr.mxu0 0.0
    %220 = vmatpush2.msra.mxu0 0.0
    %221 = vmatprep.subr.mxu0 0.0
    %222 = vmatpush2.msra.mxu0 0.0
    %223 = vmatprep.subr.mxu0 0.0
    %224 = vmatpush2.msra.mxu0 0.0
    %225 = vmatprep.subr.mxu0 0.0
    %226 = vmatpush2.msra.mxu0 0.0
    %227 = vmatprep.subr.mxu0 0.0
    %228 = vmatpush2.msra.mxu0 0.0
    %229 = vmatprep.subr.mxu0 0.0
    %230 = vmatpush2.msra.mxu0 0.0
    %231 = vmatprep.subr.mxu0 0.0
    %232 = vmatpush2.msra.mxu0 0.0
    %233 = vmatprep.mubr.f32.mxu0 0.0
    %234 = vmatmul.mubr.f32.gmra.mxu0 %v161
    %v235 = vpop.f32.mrf.mxu0
    %v236 = vadd.f32 %v143, %v235
    %v237 = vpop.f32.mrf.mxu0
    %238 = vmatprep.mubr.f32.mxu0 0.0
    %239 = vmatmul.mubr.f32.gmra.mxu0 %v163
    %v240 = vpop.f32.mrf.mxu0
    %v241 = vadd.f32 %v148, %v240
    %v242 = vpop.f32.mrf.mxu0
    %243 = vmatprep.mubr.f32.mxu0 0.0
    %244 = vmatmul.mubr.f32.gmra.mxu0 %v165
    %v245 = vpop.f32.mrf.mxu0
    %v246 = vadd.f32 %v153, %v245
    %v247 = vpop.f32.mrf.mxu0
    %248 = vmatprep.mubr.f32.mxu0 0.0
    %249 = vmatmul.mubr.f32.gmra.mxu0 %v167
    %v250 = vpop.f32.mrf.mxu0
    %v251 = vadd.f32 %v158, %v250
    %v252 = vpop.f32.mrf.mxu0
    %253 = vdwg.mxu0
    %v254 = vmax.f32 %v236, 0.0
    %v255 = vmax.f32 %v241, 0.0
    %v256 = vmax.f32 %v246, 0.0
    %v257 = vmax.f32 %v251, 0.0
    %259 = vset.pattern.permute.xlu0 32
    %260 = vperm.xlu0 %259, %v21
    %v261 = vpop.permute.xlu0 %260
    %v263 = vsel %vm160, %v21, 0
    %265 = vmatprep.subr.mxu0 0.0
    %266 = vmatpush1.msra.mxu0 0.0
    %267 = vmatprep.subr.mxu0 0.0
    %268 = vmatpush1.msra.mxu0 0.0
    %269 = vmatprep.subr.mxu0 0.0
    %270 = vmatpush1.msra.mxu0 0.0
    %271 = vmatprep.subr.mxu0 0.0
    %272 = vmatpush1.msra.mxu0 0.0
    %273 = vmatprep.subr.mxu0 0.0
    %274 = vmatpush1.msra.mxu0 0.0
    %275 = vmatprep.subr.mxu0 0.0
    %276 = vmatpush1.msra.mxu0 0.0
    %277 = vmatprep.subr.mxu0 0.0
    %278 = vmatpush1.msra.mxu0 0.0
    %279 = vmatprep.subr.mxu0 0.0
    %280 = vmatpush1.msra.mxu0 0.0
    %281 = vmatprep.subr.mxu0 0.0
    %282 = vmatpush1.msra.mxu0 0.0
    %283 = vmatprep.subr.mxu0 0.0
    %284 = vmatpush1.msra.mxu0 0.0
    %285 = vmatprep.subr.mxu0 0.0
    %286 = vmatpush1.msra.mxu0 0.0
    %287 = vmatprep.subr.mxu0 0.0
    %288 = vmatpush1.msra.mxu0 0.0
    %289 = vmatprep.subr.mxu0 0.0
    %290 = vmatpush1.msra.mxu0 %v257
    %291 = vmatprep.subr.mxu0 0.0
    %292 = vmatpush1.msra.mxu0 %v256
    %293 = vmatprep.subr.mxu0 0.0
    %294 = vmatpush1.msra.mxu0 %v255
    %295 = vmatprep.subr.mxu0 0.0
    %296 = vmatpush1.msra.mxu0 %v254
    %297 = vmatprep.subr.mxu0 0.0
    %298 = vmatpush2.msra.mxu0 0.0
    %299 = vmatprep.subr.mxu0 0.0
    %300 = vmatpush2.msra.mxu0 0.0
    %301 = vmatprep.subr.mxu0 0.0
    %302 = vmatpush2.msra.mxu0 0.0
    %303 = vmatprep.subr.mxu0 0.0
    %304 = vmatpush2.msra.mxu0 0.0
    %305 = vmatprep.subr.mxu0 0.0
    %306 = vmatpush2.msra.mxu0 0.0
    %307 = vmatprep.subr.mxu0 0.0
    %308 = vmatpush2.msra.mxu0 0.0
    %309 = vmatprep.subr.mxu0 0.0
    %310 = vmatpush2.msra.mxu0 0.0
    %311 = vmatprep.subr.mxu0 0.0
    %312 = vmatpush2.msra.mxu0 0.0
    %313 = vmatprep.subr.mxu0 0.0
    %314 = vmatpush2.msra.mxu0 0.0
    %315 = vmatprep.subr.mxu0 0.0
    %316 = vmatpush2.msra.mxu0 0.0
    %317 = vmatprep.subr.mxu0 0.0
    %318 = vmatpush2.msra.mxu0 0.0
    %319 = vmatprep.subr.mxu0 0.0
    %320 = vmatpush2.msra.mxu0 0.0
    %321 = vmatprep.subr.mxu0 0.0
    %322 = vmatpush2.msra.mxu0 0.0
    %323 = vmatprep.subr.mxu0 0.0
    %324 = vmatpush2.msra.mxu0 0.0
    %325 = vmatprep.subr.mxu0 0.0
    %326 = vmatpush2.msra.mxu0 0.0
    %327 = vmatprep.subr.mxu0 0.0
    %328 = vmatpush2.msra.mxu0 0.0
    %329 = vmatprep.mubr.f32.mxu0 0.0
    %330 = vmatmul.mubr.f32.gmra.mxu0 %v263
    %v331 = vpop.f32.mrf.mxu0
    %v332 = vadd.f32 %v261, %v331
    %v333 = vpop.f32.mrf.mxu0
    %334 = vdwg.mxu0
    %vm335 = vcmask 60416
    %v336 = vsel %vm335, %v332, -inf
    %v337 = vrot.slane %v336, 4
    %v338 = vmax.f32 %v336, %v337
    %v339 = vrot.slane %v338, 2
    %v340 = vmax.f32 %v338, %v339
    %v341 = vrot.slane %v340, 1
    %v342 = vmax.f32 %v340, %v341
    %v343 = vsub.f32 %v332, %v342
    %v344 = vmul.f32 %v343, 1.442695
    %v345 = vpow.pop %v344
    %v346 = vsel %vm335, %v345, 0.0
    %v347 = vrot.slane %v346, 4
    %v348 = vadd.f32 %v346, %v347
    %v349 = vrot.slane %v348, 2
    %v350 = vadd.f32 %v348, %v349
    %v351 = vrot.slane %v350, 1
    %v352 = vadd.f32 %v350, %v351
    %v353 = vrcp.pop %v352
    %v354 = vmul.f32 %v345, %v353
    %355 = vst.msk [vmem:[#allocation2] sm:$0xf] %vm335, %v354
    // Predicated region
    $region10: #{tpu_custom_call.1} parent=1 // pred_check
      _
    $region11: #{tpu_custom_call.1} parent=1 // pred_check_branch
      %357 = sbr.rel (0) target = $region13
    $region12: #{tpu_custom_call.1} parent=1 // pred_region
      %s359 = ssub.s32 64, 64
      %360 = vsyncadd [#allocation3], %s359
      %s362 = sshll.u32 [#allocation2], 4
      %s363 = int_to_ptr.vmem [resolvable:$true] %s362
      %365 = dma.vmem_to_hbm [thread:$0]  %s363, 64, %s2, [#allocation3]
    $region13: #{tpu_custom_call.1} parent=1 // pred_fallthru
      _
    // Predicated region
    $region14: #{tpu_custom_call.1} parent=1 // pred_check
      _
    $region15: #{tpu_custom_call.1} parent=1 // pred_check_branch
      %367 = sbr.rel (0) target = $region17
    $region16: #{tpu_custom_call.1} parent=1 // pred_region
      %368 = dma.done [#allocation3], 64
    $region17: #{tpu_custom_call.1} parent=1 // pred_fallthru
      _
    %369 = vsyncpa [#allocation3], 1

</llo_original>
